<compile_context>
chip_gen: v7x
topology: tpu7x:2x2x1
jax: 0.10.0
libtpu: 0.0.40
codegen_flags: <defaults>
</compile_context>

<pallas_src>
import math

import jax
import jax.numpy as jnp
from jax.experimental import pallas as pl
from jax.experimental.pallas import tpu as pltpu


# ---------------------------------------------------------------------------
# Kernels
# ---------------------------------------------------------------------------

def _softmax_mid_kernel(x_ref, o_ref):
    # x_ref / o_ref: (TILE_PRE, C, TILE_P) tile; softmax over axis 1 (C).
    # C lives on the sublane axis, so the reduction is a few VPU max/add ops
    # across sublane rows; the lane axis stays fully dense.
    x = x_ref[...].astype(jnp.float32)
    m = jnp.max(x, axis=1, keepdims=True)
    e = jnp.exp(x - m)
    s = jnp.sum(e, axis=1, keepdims=True)
    # Exact reciprocal: keeps the 1e-6 tolerance of the reference check.
    o_ref[...] = (e * pl.reciprocal(s, approx=False)).astype(o_ref.dtype)


def _softmax_last_kernel(x_ref, o_ref):
    # x_ref / o_ref: (TILE_R, cols) tile; softmax over the last (lane) axis.
    x = x_ref[...].astype(jnp.float32)
    m = jnp.max(x, axis=-1, keepdims=True)
    e = jnp.exp(x - m)
    s = jnp.sum(e, axis=-1, keepdims=True)
    o_ref[...] = (e * pl.reciprocal(s, approx=False)).astype(o_ref.dtype)


# ---------------------------------------------------------------------------
# Tile-size selection (generation-safe: ~2 MiB per buffer)
# ---------------------------------------------------------------------------

_TARGET_TILE_BYTES = 2 * 1024 * 1024  # per buffer; x4 for in+out double-buffer


def _pick_lane_tile(post):
    """Lane-axis tile: multiple of 128 (or the full extent)."""
    if post % 128 != 0:
        return post  # block dim == full array dim is always legal
    for cand in (2048, 1024, 512, 256, 128):
        if post % cand == 0:
            return cand
    return post


def _pick_pre_tile(pre, c, lane_tile, itemsize):
    """Leading-axis tile (unconstrained by the (8,128) rule)."""
    cap = max(1, _TARGET_TILE_BYTES // (c * lane_tile * itemsize))
    t = min(cap, pre)
    while pre % t != 0:
        t -= 1
    return t


def _pick_row_tile(rows, cols, itemsize):
    """Row tile for the dim==last path: multiple of 8 (or the full extent)."""
    if rows % 8 != 0:
        return rows
    cap = max(8, (_TARGET_TILE_BYTES // max(1, cols * itemsize)) // 8 * 8)
    t = min(cap, rows)
    t = (t // 8) * 8
    while rows % t != 0:
        t -= 8
    return t


# ---------------------------------------------------------------------------
# pallas_call wrappers
# ---------------------------------------------------------------------------

def _softmax_mid(x3d):
    pre, c, post = x3d.shape
    itemsize = jnp.dtype(x3d.dtype).itemsize
    tile_p = _pick_lane_tile(post)
    tile_pre = _pick_pre_tile(pre, c, tile_p, itemsize)
    grid = (pre // tile_pre, post // tile_p)

    cost = pl.CostEstimate(
        flops=5 * x3d.size,
        transcendentals=x3d.size,
        bytes_accessed=2 * x3d.size * itemsize,
    )
    return pl.pallas_call(
        _softmax_mid_kernel,
        out_shape=jax.ShapeDtypeStruct(x3d.shape, x3d.dtype),
        grid_spec=pltpu.PrefetchScalarGridSpec(
            num_scalar_prefetch=0,
            grid=grid,
            in_specs=[pl.BlockSpec((tile_pre, c, tile_p),
                                   lambda i, j: (i, 0, j))],
            out_specs=pl.BlockSpec((tile_pre, c, tile_p),
                                   lambda i, j: (i, 0, j)),
        ),
        compiler_params=pltpu.CompilerParams(
            dimension_semantics=("parallel", "parallel"),
        ),
        cost_estimate=cost,
    )(x3d)


def _softmax_last(x2d):
    rows, cols = x2d.shape
    itemsize = jnp.dtype(x2d.dtype).itemsize
    tile_r = _pick_row_tile(rows, cols, itemsize)
    grid = (pl.cdiv(rows, tile_r),)
    # TODO(synk): rows whose full length does not fit a single VMEM block
    # would need a two-pass / online-softmax over a column grid axis; not
    # required for the shapes this module is tested with.
    cost = pl.CostEstimate(
        flops=5 * x2d.size,
        transcendentals=x2d.size,
        bytes_accessed=2 * x2d.size * itemsize,
    )
    return pl.pallas_call(
        _softmax_last_kernel,
        out_shape=jax.ShapeDtypeStruct((rows, cols), x2d.dtype),
        grid_spec=pltpu.PrefetchScalarGridSpec(
            num_scalar_prefetch=0,
            grid=grid,
            in_specs=[pl.BlockSpec((tile_r, cols), lambda i: (i, 0))],
            out_specs=pl.BlockSpec((tile_r, cols), lambda i: (i, 0)),
        ),
        compiler_params=pltpu.CompilerParams(
            dimension_semantics=("parallel",),
        ),
        cost_estimate=cost,
    )(x2d)


def f_softmax(x, dim):
    """Equivalent of torch.nn.functional.softmax(x, dim)."""
    ndim = x.ndim
    dim = dim % ndim
    shape = x.shape

    if dim == ndim - 1:
        # Softmax over the trailing axis: (rows, cols) with the reduction on
        # the lane axis, row-tiled grid.
        cols = shape[-1]
        rows = int(math.prod(shape[:-1]))
        y2d = _softmax_last(x.reshape(rows, cols))
        return y2d.reshape(shape)

    # Softmax over an interior axis (e.g. NCHW dim=1): reshape-only layout
    # (pre, C, post) — keeps the big contiguous `post` axis lane-dense and
    # avoids any transpose / extra HBM pass around the kernel.
    pre = int(math.prod(shape[:dim]))
    c = shape[dim]
    post = int(math.prod(shape[dim + 1:]))
    y3d = _softmax_mid(x.reshape(pre, c, post))
    return y3d.reshape(shape)


if __name__ == "__main__":
    key = jax.random.PRNGKey(0)
    # NCHW input, softmax over channel dim (dim=1), like FSoftmax(dim=1).
    x = jax.random.normal(key, (2, 4, 16, 16), dtype=jnp.float32)
    dim = 1

    y = f_softmax(x, dim)
    y = jax.block_until_ready(y)

    # Reference check against plain-JAX softmax.
    y_ref = jax.nn.softmax(x, axis=dim)
    assert y.shape == x.shape
    assert jnp.allclose(y, y_ref, atol=1e-6, rtol=1e-6)
    assert jnp.allclose(jnp.sum(y, axis=dim), 1.0, atol=1e-5)

    print("KERNEL_OK")
</pallas_src>

<mosaic_0001>
module attributes {stable_mosaic.version = 11 : i64} {
  func.func @_softmax_mid_kernel(%arg0: i32, %arg1: i32, %arg2: memref<2x4x256xf32, #tpu.memory_space<vmem>>, %arg3: memref<2x4x256xf32, #tpu.memory_space<vmem>>) attributes {dimension_semantics = [#tpu.dimension_semantics<parallel>, #tpu.dimension_semantics<parallel>], iteration_bounds = array<i64: 1, 1>, scalar_prefetch = 0 : i64, scratch_operands = 0 : i64, tpu.core_type = #tpu.core_type<tc>, window_params = [{transform_indices = @transform_0, window_bounds = array<i64: 2, 4, 256>}, {transform_indices = @transform_1, window_bounds = array<i64: 2, 4, 256>}]} {
    %c0 = arith.constant 0 : index
    %c0_0 = arith.constant 0 : index
    %c0_1 = arith.constant 0 : index
    %0 = vector.load %arg2[%c0, %c0_0, %c0_1] : memref<2x4x256xf32, #tpu.memory_space<vmem>>, vector<2x4x256xf32>
    %cst = arith.constant dense<0xFF800000> : vector<2x256xf32>
    %1 = vector.multi_reduction <maximumf>, %0, %cst [1] : vector<2x4x256xf32> to vector<2x256xf32>
    %2 = vector.shape_cast %1 : vector<2x256xf32> to vector<2x1x256xf32>
    %3 = vector.broadcast %2 : vector<2x1x256xf32> to vector<2x4x256xf32>
    %4 = arith.subf %0, %3 : vector<2x4x256xf32>
    %5 = math.exp %4 : vector<2x4x256xf32>
    %cst_2 = arith.constant dense<0.000000e+00> : vector<2x256xf32>
    %6 = vector.multi_reduction <add>, %5, %cst_2 [1] : vector<2x4x256xf32> to vector<2x256xf32>
    %7 = vector.shape_cast %6 : vector<2x256xf32> to vector<2x1x256xf32>
    %8 = tpu.reciprocal %7 : vector<2x1x256xf32> -> vector<2x1x256xf32>
    %9 = vector.broadcast %8 : vector<2x1x256xf32> to vector<2x4x256xf32>
    %10 = arith.mulf %5, %9 : vector<2x4x256xf32>
    %c0_3 = arith.constant 0 : index
    %c0_4 = arith.constant 0 : index
    %c0_5 = arith.constant 0 : index
    %11 = vector.load %arg3[%c0_3, %c0_4, %c0_5] : memref<2x4x256xf32, #tpu.memory_space<vmem>>, vector<2x4x256xf32>
    tpu.vector_store %arg3[%c0_3, %c0_4, %c0_5], %10 {strides = array<i32>} : memref<2x4x256xf32, #tpu.memory_space<vmem>>, vector<2x4x256xf32>,
    return
  }
  func.func @transform_0(%arg0: i32, %arg1: i32) -> (i32, i32, i32) {
    %c0_i32 = arith.constant 0 : i32
    %c0_i32_0 = arith.constant 0 : i32
    return %arg0, %c0_i32, %arg1 : i32, i32, i32
  }
  func.func @transform_1(%arg0: i32, %arg1: i32) -> (i32, i32, i32) {
    %c0_i32 = arith.constant 0 : i32
    %c0_i32_0 = arith.constant 0 : i32
    return %arg0, %c0_i32, %arg1 : i32, i32, i32
  }
}

</mosaic_0001>

<llo_original>
// kernel: tpu_custom_call.1
$region0: #{tpu_custom_call.1}
  #allocation0 [shape = 'u32[]', space=smem, size = 0x4, offset = 0x4, fixed_abs, tag = 'smem constant byte address 0x4 - core index']
  #allocation1 [shape = 'u32[144,128]{1,0:T(1,128)}', space=vmem, size = 0x12000, scoped, tag = 'internal scratch']
  %s0 = inlined_call_operand.hbm [shape: f32[2,4,256], index: 0, kind: input, shape index: {}]
  %s1 = inlined_call_operand.hbm [shape: f32[2,4,256], index: 1, kind: output, shape index: {}]
  %s2 = sld [smem:[#allocation0]]
  $region18: #{tpu_custom_call.1} parent=0
    _
  %s4 = ssub.s32 1, %s2
  %s5 = scalar_select 0, %s4, %s2
  $region1: #{tpu_custom_call.1} parent=0
    #allocation2 [shape = 'u8[8192]{0}', space=vmem, size = 0x2000, scoped, tag = 'input window, operand 0, single buffered']
    #allocation3 [shape = 's32[1]{0}', space=sflag, size = 0x4, scoped, tag = 'scoped memory for tpu_custom_call.1']
    #allocation4 [shape = 's32[1]{0}', space=sflag, size = 0x4, scoped, tag = 'scoped memory for tpu_custom_call.1']
    #allocation5 [shape = 'u8[8192]{0}', space=vmem, size = 0x2000, scoped, tag = 'output window, operand 0, single buffered']
    %6 = vsyncpa [#allocation3], 0
    %7 = vsyncpa [#allocation4], 0
    // Predicated region
    $region2: #{tpu_custom_call.1} parent=1 // pred_check
      _
    $region3: #{tpu_custom_call.1} parent=1 // pred_check_branch
      %9 = sbr.rel (0) target = $region5
    $region4: #{tpu_custom_call.1} parent=1 // pred_region
      %s11 = ssub.s32 256, 256
      %12 = vsyncadd [#allocation3], %s11
      %s13 = sshll.u32 [#allocation2], 4
      %s14 = int_to_ptr.vmem [resolvable:$true] %s13
      %19 = dma.hbm_to_vmem [thread:$0]  %s0, 256, %s14, [#allocation3], 128, 128, 8
    $region5: #{tpu_custom_call.1} parent=1 // pred_fallthru
      _
    // Predicated region
    $region6: #{tpu_custom_call.1} parent=1 // pred_check
      _
    $region7: #{tpu_custom_call.1} parent=1 // pred_check_branch
      %21 = sbr.rel (0) target = $region9
    $region8: #{tpu_custom_call.1} parent=1 // pred_region
      %22 = dma.done [#allocation3], 256
    $region9: #{tpu_custom_call.1} parent=1 // pred_fallthru
      _
    %v23 = vld [vmem:[#allocation2] sm:$0xff]
    %v24 = vld [vmem:[#allocation2 + $0x8] sm:$0xff]
    %v27 = vcombine.high %v23, %v23
    %v28 = vcombine.high %v24, %v24
    %vm31 = vcmask 1043456
    %v32 = vsel %vm31, %v23, -inf
    %v33 = vrot.slane %v32, 4
    %v34 = vmax.f32 %v32, %v33
    %v35 = vrot.slane %v34, 2
    %v36 = vmax.f32 %v34, %v35
    %v37 = vrot.slane %v36, 1
    %v38 = vmax.f32 %v36, %v37
    %v39 = vsel %vm31, %v27, -inf
    %v40 = vrot.slane %v39, 4
    %v41 = vmax.f32 %v39, %v40
    %v42 = vrot.slane %v41, 2
    %v43 = vmax.f32 %v41, %v42
    %v44 = vrot.slane %v43, 1
    %v45 = vmax.f32 %v43, %v44
    %v46 = vsel %vm31, %v24, -inf
    %v47 = vrot.slane %v46, 4
    %v48 = vmax.f32 %v46, %v47
    %v49 = vrot.slane %v48, 2
    %v50 = vmax.f32 %v48, %v49
    %v51 = vrot.slane %v50, 1
    %v52 = vmax.f32 %v50, %v51
    %v53 = vsel %vm31, %v28, -inf
    %v54 = vrot.slane %v53, 4
    %v55 = vmax.f32 %v53, %v54
    %v56 = vrot.slane %v55, 2
    %v57 = vmax.f32 %v55, %v56
    %v58 = vrot.slane %v57, 1
    %v59 = vmax.f32 %v57, %v58
    %v64 = vcombine.low %v38, %v45
    %v65 = vcombine.low %v52, %v59
    %v68 = vsub.f32 %v23, %v64
    %v69 = vsub.f32 %v24, %v65
    %v70 = vmul.f32 %v68, 1.442695
    %v71 = vpow.pop %v70
    %v72 = vmul.f32 %v69, 1.442695
    %v73 = vpow.pop %v72
    %v76 = vcombine.high %v71, %v71
    %v77 = vcombine.high %v73, %v73
    %v80 = vsel %vm31, %v71, 0.0
    %v81 = vrot.slane %v80, 4
    %v82 = vadd.f32 %v80, %v81
    %v83 = vrot.slane %v82, 2
    %v84 = vadd.f32 %v82, %v83
    %v85 = vrot.slane %v84, 1
    %v86 = vadd.f32 %v84, %v85
    %v87 = vsel %vm31, %v76, 0.0
    %v88 = vrot.slane %v87, 4
    %v89 = vadd.f32 %v87, %v88
    %v90 = vrot.slane %v89, 2
    %v91 = vadd.f32 %v89, %v90
    %v92 = vrot.slane %v91, 1
    %v93 = vadd.f32 %v91, %v92
    %v94 = vsel %vm31, %v73, 0.0
    %v95 = vrot.slane %v94, 4
    %v96 = vadd.f32 %v94, %v95
    %v97 = vrot.slane %v96, 2
    %v98 = vadd.f32 %v96, %v97
    %v99 = vrot.slane %v98, 1
    %v100 = vadd.f32 %v98, %v99
    %v101 = vsel %vm31, %v77, 0.0
    %v102 = vrot.slane %v101, 4
    %v103 = vadd.f32 %v101, %v102
    %v104 = vrot.slane %v103, 2
    %v105 = vadd.f32 %v103, %v104
    %v106 = vrot.slane %v105, 1
    %v107 = vadd.f32 %v105, %v106
    %v108 = vrcp.pop %v86
    %v109 = vrcp.pop %v93
    %v110 = vrcp.pop %v100
    %v111 = vrcp.pop %v107
    %v116 = vcombine.low %v108, %v109
    %v117 = vcombine.low %v110, %v111
    %v120 = vmul.f32 %v71, %v116
    %v121 = vmul.f32 %v73, %v117
    %122 = vst [vmem:[#allocation5] sm:$0xff] %v120
    %123 = vst [vmem:[#allocation5 + $0x8] sm:$0xff] %v121
    // Predicated region
    $region10: #{tpu_custom_call.1} parent=1 // pred_check
      _
    $region11: #{tpu_custom_call.1} parent=1 // pred_check_branch
      %125 = sbr.rel (0) target = $region13
    $region12: #{tpu_custom_call.1} parent=1 // pred_region
      %s127 = ssub.s32 256, 256
      %128 = vsyncadd [#allocation4], %s127
      %s129 = sshll.u32 [#allocation5], 4
      %s130 = int_to_ptr.vmem [resolvable:$true] %s129
      %135 = dma.vmem_to_hbm [thread:$0]  %s130, 256, %s1, [#allocation4], 128, 128, 8
    $region13: #{tpu_custom_call.1} parent=1 // pred_fallthru
      _
    // Predicated region
    $region14: #{tpu_custom_call.1} parent=1 // pred_check
      _
    $region15: #{tpu_custom_call.1} parent=1 // pred_check_branch
      %137 = sbr.rel (0) target = $region17
    $region16: #{tpu_custom_call.1} parent=1 // pred_region
      %138 = dma.done [#allocation4], 256
    $region17: #{tpu_custom_call.1} parent=1 // pred_fallthru
      _
    %139 = vsyncpa [#allocation3], 1
    %140 = vsyncpa [#allocation4], 1

</llo_original>
